<compile_context>
chip_gen: v7x
topology: tpu7x:2x2x1
jax: 0.10.0
libtpu: 0.0.40
codegen_flags: <defaults>
</compile_context>

<pallas_src>
import functools

import jax
import jax.numpy as jnp
from jax.experimental import pallas as pl
from jax.experimental.pallas import tpu as pltpu


def _mlp_kernel(*refs, n_inputs, n_hidden, reduce_last):
    """Fused MLP: (split) Linear+ReLU, (n_hidden-1) x Linear+ReLU, final Linear.

    refs layout:
      x_0..x_{n_inputs-1},
      w0_0..w0_{n_inputs-1}, b0,
      (w_i, b_i) for the remaining hidden layers,
      w_last, b_last,
      out_ref
    """
    out_ref = refs[-1]
    x_refs = refs[:n_inputs]
    p = refs[n_inputs:-1]

    idx = 0
    # First hidden layer: the "concat" is fused by summing per-input partial matmuls.
    acc = None
    for xr in x_refs:
        w = p[idx][...]
        idx += 1
        part = jnp.dot(xr[...].astype(w.dtype), w,
                       preferred_element_type=jnp.float32)
        acc = part if acc is None else acc + part
    b0 = p[idx][...]
    idx += 1
    h = jnp.maximum(acc + b0, 0.0)  # torch.relu on the f32 accumulator

    # Remaining hidden layers.
    for _ in range(n_hidden - 1):
        w = p[idx][...]
        b = p[idx + 1][...]
        idx += 2
        h = jnp.dot(h.astype(w.dtype), w, preferred_element_type=jnp.float32) + b
        h = jnp.maximum(h, 0.0)

    w_last = p[idx][...]
    b_last = p[idx + 1][...]
    if reduce_last:
        # out_dim == 1: VPU multiply + lane reduction instead of an N=1 MXU matmul.
        # w_last is pre-shaped as a [1, hidden] row in the wrapper.
        y = jnp.sum(h * w_last.astype(jnp.float32), axis=-1, keepdims=True) + b_last
    else:
        y = jnp.dot(h.astype(w_last.dtype), w_last,
                    preferred_element_type=jnp.float32) + b_last
    # TODO(synk): last_activation is None for this Network instance; apply it here
    # if a last_activation were supplied.
    out_ref[...] = y.astype(out_ref.dtype)


def _pick_batch_tile(B, batch_tile):
    if batch_tile is not None:
        return batch_tile
    # Biggest tile that still leaves >= 2 grid steps (pipelining + both v7x TCs
    # busy) while amortizing the ~0.35us per-step overhead.
    for t in (1024, 512, 256, 128, 64, 32, 16, 8):
        if t <= max(B // 2, 1) and B % t == 0:
            return t
    return B


def network_forward(params, *inputs, batch_tile=None, compute_dtype=jnp.bfloat16):
    """Run the Network forward pass.

    params: list of (W_t, b) pairs with W_t shaped [in, out] (transposed PyTorch
            weight), b shaped [1, out], f32.  Last pair is the output layer.
    inputs: one or more [batch, feat_i] arrays; their feature dims must sum to
            the first layer's input dim.  (No wrapper-side concat is performed.)
    """
    assert len(inputs) >= 1
    B = int(inputs[0].shape[0])
    in_dims = [int(x.shape[-1]) for x in inputs]
    d_in_total = sum(in_dims)

    w0, b0 = params[0]
    assert int(w0.shape[0]) == d_in_total, "input feature dims must sum to input_dim"
    out_dim = int(params[-1][0].shape[1])
    n_hidden = len(params) - 1
    assert n_hidden >= 1, "layer_num must be >= 2"

    tb = _pick_batch_tile(B, batch_tile)
    assert B % tb == 0, "batch must be divisible by batch_tile"

    reduce_last = (out_dim == 1)

    # Split the first layer's weight at trace time (static slices, tiny arrays).
    w0_parts = []
    off = 0
    for d in in_dims:
        w0_parts.append(w0[off:off + d, :].astype(compute_dtype))
        off += d

    flat = list(inputs) + w0_parts + [b0.astype(jnp.float32)]
    for w, b in params[1:-1]:
        flat += [w.astype(compute_dtype), b.astype(jnp.float32)]
    w_last, b_last = params[-1]
    if reduce_last:
        w_last_k = w_last.reshape(1, -1).astype(compute_dtype)  # [1, hidden] row
    else:
        w_last_k = w_last.astype(compute_dtype)
    flat += [w_last_k, b_last.astype(jnp.float32)]

    # Batch is tiled over the grid; weights/biases use a constant index_map so
    # they are DMA'd once and stay resident in VMEM across all grid steps.
    # TODO(synk): pipeline_mode=pl.Buffered(1) on the weight specs would halve
    # their (already tiny) VMEM double-buffer footprint for very large hidden_dim.
    in_specs = [pl.BlockSpec((tb, d), lambda i: (i, 0)) for d in in_dims]
    in_specs += [pl.BlockSpec(a.shape, lambda i: (0, 0)) for a in flat[len(inputs):]]
    # TODO(synk): a lane-dense (1, B) output layout would avoid masked [tb, 1]
    # stores; the win is negligible at out_dim=1 for these sizes.
    out_spec = pl.BlockSpec((tb, out_dim), lambda i: (i, 0))

    kernel = functools.partial(
        _mlp_kernel, n_inputs=len(inputs), n_hidden=n_hidden, reduce_last=reduce_last)

    return pl.pallas_call(
        kernel,
        out_shape=jax.ShapeDtypeStruct((B, out_dim), jnp.float32),
        grid_spec=pltpu.PrefetchScalarGridSpec(
            num_scalar_prefetch=0,
            grid=(B // tb,),
            in_specs=in_specs,
            out_specs=out_spec,
        ),
        compiler_params=pltpu.CompilerParams(
            dimension_semantics=("parallel",)),
    )(*flat)


def orthogonal(key, shape, dtype=jnp.float32):
    """Deterministic stand-in for nn.init.orthogonal_ (gain=1)."""
    rows, cols = shape
    n = max(rows, cols)
    a = jax.random.normal(key, (n, n), dtype=jnp.float32)
    q, r = jnp.linalg.qr(a)
    q = q * jnp.sign(jnp.diag(r))[None, :]
    return q[:rows, :cols].astype(dtype)


def make_network_params(key, layer_num, input_dim, output_dim, hidden_dim):
    """Build Linear weights like Network.__init__/network_init.

    Returns list of (W_t, b) with W_t = W.T shaped [in, out], b zeros [1, out].
    """
    layers_unit = [input_dim] + [hidden_dim] * (layer_num - 1)
    dims = list(zip(layers_unit[:-1], layers_unit[1:])) + [(layers_unit[-1], output_dim)]
    params = []
    for (d_in, d_out) in dims:
        key, sub = jax.random.split(key)
        w_pt = orthogonal(sub, (d_out, d_in))  # PyTorch Linear weight is [out, in]
        params.append((w_pt.T, jnp.zeros((1, d_out), jnp.float32)))
    return params


def reference_forward(params, *inputs, compute_dtype=jnp.bfloat16):
    """Pure-JAX reference mirroring the kernel's precision (bf16 MXU, f32 acc)."""
    x = jnp.concatenate(inputs, axis=-1)
    h = x
    for w, b in params[:-1]:
        h = jnp.dot(h.astype(compute_dtype), w.astype(compute_dtype),
                    preferred_element_type=jnp.float32) + b
        h = jnp.maximum(h, 0.0)
    w_last, b_last = params[-1]
    if int(w_last.shape[1]) == 1:
        w_row = w_last.reshape(1, -1).astype(compute_dtype).astype(jnp.float32)
        return jnp.sum(h * w_row, axis=-1, keepdims=True) + b_last
    return jnp.dot(h.astype(compute_dtype), w_last.astype(compute_dtype),
                   preferred_element_type=jnp.float32) + b_last


if __name__ == "__main__":
    # Network(layer_num=3, input_dim=32, output_dim=1, hidden_dim=64, relu, None)
    layer_num, input_dim, output_dim, hidden_dim = 3, 32, 1, 64
    batch = 256

    key = jax.random.PRNGKey(0)
    k_params, k_x = jax.random.split(key)

    params = make_network_params(k_params, layer_num, input_dim, output_dim, hidden_dim)
    x = jax.random.normal(k_x, (batch, input_dim), dtype=jnp.float32)

    # Single-input forward (matches Network.forward(x)); auto tile -> grid=(2,),
    # pipelined and megacore-parallel.
    fwd = jax.jit(network_forward)
    out = jax.block_until_ready(fwd(params, x))

    ref = reference_forward(params, x)
    assert out.shape == (batch, output_dim)
    assert jnp.allclose(out, ref, atol=1e-3, rtol=1e-3), "mismatch vs reference"

    # Multi-input path: the first-layer matmul is split in-kernel (no wrapper concat).
    state, action = x[:, :24], x[:, 24:]
    fwd2 = jax.jit(functools.partial(network_forward, batch_tile=128))
    out2 = jax.block_until_ready(fwd2(params, state, action))
    assert jnp.allclose(out2, ref, atol=1e-3, rtol=1e-3), "mismatch (split-input path)"

    print("KERNEL_OK")
</pallas_src>

<mosaic_0001>
module attributes {stable_mosaic.version = 11 : i64} {
  func.func @_mlp_kernel(%arg0: i32, %arg1: memref<128x32xf32, #tpu.memory_space<vmem>>, %arg2: memref<32x64xbf16, #tpu.memory_space<vmem>>, %arg3: memref<1x64xf32, #tpu.memory_space<vmem>>, %arg4: memref<64x64xbf16, #tpu.memory_space<vmem>>, %arg5: memref<1x64xf32, #tpu.memory_space<vmem>>, %arg6: memref<1x64xbf16, #tpu.memory_space<vmem>>, %arg7: memref<1x1xf32, #tpu.memory_space<vmem>>, %arg8: memref<128x1xf32, #tpu.memory_space<vmem>>) attributes {dimension_semantics = [#tpu.dimension_semantics<parallel>], iteration_bounds = array<i64: 2>, scalar_prefetch = 0 : i64, scratch_operands = 0 : i64, tpu.core_type = #tpu.core_type<tc>, window_params = [{transform_indices = @transform_0, window_bounds = array<i64: 128, 32>}, {pipeline_mode = #tpu.pipeline_mode<synchronous>, transform_indices = @transform_1, window_bounds = array<i64: 32, 64>}, {pipeline_mode = #tpu.pipeline_mode<synchronous>, transform_indices = @transform_2, window_bounds = array<i64: 1, 64>}, {pipeline_mode = #tpu.pipeline_mode<synchronous>, transform_indices = @transform_3, window_bounds = array<i64: 64, 64>}, {pipeline_mode = #tpu.pipeline_mode<synchronous>, transform_indices = @transform_4, window_bounds = array<i64: 1, 64>}, {pipeline_mode = #tpu.pipeline_mode<synchronous>, transform_indices = @transform_5, window_bounds = array<i64: 1, 64>}, {pipeline_mode = #tpu.pipeline_mode<synchronous>, transform_indices = @transform_6, window_bounds = array<i64: 1, 1>}, {transform_indices = @transform_7, window_bounds = array<i64: 128, 1>}]} {
    %c0 = arith.constant 0 : index
    %c0_0 = arith.constant 0 : index
    %0 = vector.load %arg2[%c0, %c0_0] : memref<32x64xbf16, #tpu.memory_space<vmem>>, vector<32x64xbf16>
    %c0_1 = arith.constant 0 : index
    %c0_2 = arith.constant 0 : index
    %1 = vector.load %arg1[%c0_1, %c0_2] : memref<128x32xf32, #tpu.memory_space<vmem>>, vector<128x32xf32>
    %2 = arith.truncf %1 : vector<128x32xf32> to vector<128x32xbf16>
    %cst = arith.constant dense<0.000000e+00> : vector<128x64xf32>
    %3 = tpu.matmul %2, %0, %cst {dimension_numbers = #tpu.dot_dimension_numbers<[1], [0], [0], [1], [0, 0, 1, 1], [], []>} : vector<128x32xbf16>, vector<32x64xbf16>, vector<128x64xf32> -> vector<128x64xf32>
    %c0_3 = arith.constant 0 : index
    %c0_4 = arith.constant 0 : index
    %4 = vector.load %arg3[%c0_3, %c0_4] : memref<1x64xf32, #tpu.memory_space<vmem>>, vector<1x64xf32>
    %5 = vector.broadcast %4 : vector<1x64xf32> to vector<128x64xf32>
    %6 = arith.addf %3, %5 : vector<128x64xf32>
    %cst_5 = arith.constant 0.000000e+00 : f32
    %7 = vector.broadcast %cst_5 : f32 to vector<128x64xf32>
    %8 = arith.maximumf %6, %7 : vector<128x64xf32>
    %c0_6 = arith.constant 0 : index
    %c0_7 = arith.constant 0 : index
    %9 = vector.load %arg4[%c0_6, %c0_7] : memref<64x64xbf16, #tpu.memory_space<vmem>>, vector<64x64xbf16>
    %c0_8 = arith.constant 0 : index
    %c0_9 = arith.constant 0 : index
    %10 = vector.load %arg5[%c0_8, %c0_9] : memref<1x64xf32, #tpu.memory_space<vmem>>, vector<1x64xf32>
    %11 = arith.truncf %8 : vector<128x64xf32> to vector<128x64xbf16>
    %cst_10 = arith.constant dense<0.000000e+00> : vector<128x64xf32>
    %12 = tpu.matmul %11, %9, %cst_10 {dimension_numbers = #tpu.dot_dimension_numbers<[1], [0], [0], [1], [0, 0, 1, 1], [], []>} : vector<128x64xbf16>, vector<64x64xbf16>, vector<128x64xf32> -> vector<128x64xf32>
    %13 = vector.broadcast %10 : vector<1x64xf32> to vector<128x64xf32>
    %14 = arith.addf %12, %13 : vector<128x64xf32>
    %cst_11 = arith.constant 0.000000e+00 : f32
    %15 = vector.broadcast %cst_11 : f32 to vector<128x64xf32>
    %16 = arith.maximumf %14, %15 : vector<128x64xf32>
    %c0_12 = arith.constant 0 : index
    %c0_13 = arith.constant 0 : index
    %17 = vector.load %arg6[%c0_12, %c0_13] : memref<1x64xbf16, #tpu.memory_space<vmem>>, vector<1x64xbf16>
    %c0_14 = arith.constant 0 : index
    %c0_15 = arith.constant 0 : index
    %18 = vector.load %arg7[%c0_14, %c0_15] : memref<1x1xf32, #tpu.memory_space<vmem>>, vector<1x1xf32>
    %19 = arith.extf %17 : vector<1x64xbf16> to vector<1x64xf32>
    %20 = vector.broadcast %19 : vector<1x64xf32> to vector<128x64xf32>
    %21 = arith.mulf %16, %20 : vector<128x64xf32>
    %cst_16 = arith.constant dense<0.000000e+00> : vector<128xf32>
    %22 = vector.multi_reduction <add>, %21, %cst_16 [1] : vector<128x64xf32> to vector<128xf32>
    %23 = vector.shape_cast %22 : vector<128xf32> to vector<128x1xf32>
    %24 = vector.broadcast %18 : vector<1x1xf32> to vector<128x1xf32>
    %25 = arith.addf %23, %24 : vector<128x1xf32>
    %c0_17 = arith.constant 0 : index
    %c0_18 = arith.constant 0 : index
    %26 = vector.load %arg8[%c0_17, %c0_18] : memref<128x1xf32, #tpu.memory_space<vmem>>, vector<128x1xf32>
    tpu.vector_store %arg8[%c0_17, %c0_18], %25 {strides = array<i32>} : memref<128x1xf32, #tpu.memory_space<vmem>>, vector<128x1xf32>,
    return
  }
  func.func @transform_0(%arg0: i32) -> (i32, i32) {
    %c0_i32 = arith.constant 0 : i32
    %c0_i32_0 = arith.constant 0 : i32
    return %arg0, %c0_i32 : i32, i32
  }
  func.func @transform_1(%arg0: i32) -> (i32, i32) {
    %c0_i32 = arith.constant 0 : i32
    %c0_i32_0 = arith.constant 0 : i32
    %c0_i32_1 = arith.constant 0 : i32
    return %c0_i32, %c0_i32_0 : i32, i32
  }
  func.func @transform_2(%arg0: i32) -> (i32, i32) {
    %c0_i32 = arith.constant 0 : i32
    %c0_i32_0 = arith.constant 0 : i32
    %c0_i32_1 = arith.constant 0 : i32
    return %c0_i32, %c0_i32_0 : i32, i32
  }
  func.func @transform_3(%arg0: i32) -> (i32, i32) {
    %c0_i32 = arith.constant 0 : i32
    %c0_i32_0 = arith.constant 0 : i32
    %c0_i32_1 = arith.constant 0 : i32
    return %c0_i32, %c0_i32_0 : i32, i32
  }
  func.func @transform_4(%arg0: i32) -> (i32, i32) {
    %c0_i32 = arith.constant 0 : i32
    %c0_i32_0 = arith.constant 0 : i32
    %c0_i32_1 = arith.constant 0 : i32
    return %c0_i32, %c0_i32_0 : i32, i32
  }
  func.func @transform_5(%arg0: i32) -> (i32, i32) {
    %c0_i32 = arith.constant 0 : i32
    %c0_i32_0 = arith.constant 0 : i32
    %c0_i32_1 = arith.constant 0 : i32
    return %c0_i32, %c0_i32_0 : i32, i32
  }
  func.func @transform_6(%arg0: i32) -> (i32, i32) {
    %c0_i32 = arith.constant 0 : i32
    %c0_i32_0 = arith.constant 0 : i32
    %c0_i32_1 = arith.constant 0 : i32
    return %c0_i32, %c0_i32_0 : i32, i32
  }
  func.func @transform_7(%arg0: i32) -> (i32, i32) {
    %c0_i32 = arith.constant 0 : i32
    %c0_i32_0 = arith.constant 0 : i32
    return %arg0, %c0_i32 : i32, i32
  }
}

</mosaic_0001>

<llo_original>
// kernel: network_forward.1
$region0: #{network_forward.1}
  #allocation0 [shape = 'u32[]', space=smem, size = 0x4, offset = 0x4, fixed_abs, tag = 'smem constant byte address 0x4 - core index']
  #allocation1 [shape = 'u32[144,128]{1,0:T(1,128)}', space=vmem, size = 0x12000, scoped, tag = 'internal scratch']
  #allocation2 [shape = 'f32[1,1]{1,0:T(1,128)S(1)}', space=vmem, size = 0x200, scoped, tag = 'scoped memory for network_forward.1']
  %s0 = inlined_call_operand.vmem [shape: f32[256,32], index: 0, kind: input, shape index: {}]
  %s1 = inlined_call_operand.vmem [shape: bf16[32,64], index: 1, kind: input, shape index: {}]
  %s2 = inlined_call_operand.vmem [shape: f32[1,64], index: 2, kind: input, shape index: {}]
  %s3 = inlined_call_operand.vmem [shape: bf16[64,64], index: 3, kind: input, shape index: {}]
  %s4 = inlined_call_operand.vmem [shape: f32[1,64], index: 4, kind: input, shape index: {}]
  %s5 = inlined_call_operand.vmem [shape: bf16[1,64], index: 5, kind: input, shape index: {}]
  %s6 = inlined_call_operand.<no memory space> [shape: f32[1,1], index: 6, kind: input, shape index: {}]
  %s7 = inlined_call_operand.vmem [shape: f32[256,1], index: 7, kind: output, shape index: {}]
  %s8 = sld [smem:[#allocation0]]
  $region61: #{network_forward.1} parent=0
    _
  %s10 = ssub.s32 1, %s8
  %s11 = scalar_select 0, %s10, %s8
  %v12 = vstv %s6
  %13 = vst [vmem:[#allocation2] sm:$0x1] %v12
  loop: start=0, step=1, limit=4
  $region2: #{network_forward.1} parent=0 // loop_pre_header
    _
  $region3: #{network_forward.1} parent=0 // loop_header
    %s15 = sphi 0, %s19
    %p16 = scmp.ge.s32.totalorder %s15, 4
    %s25 = sphi 0, %s27
    %s28 = sphi 0, %s25
    %s29 = sphi 0, %s28
    %s45 = sphi 0, %s29
    %s49 = sphi 0, %s49
    %s51 = sphi 0, %s49
    %s52 = sphi 0, %s51
    %s66 = sphi 0, %s52
    %s70 = sphi 0, %s70
    %s72 = sphi 0, %s70
    %s73 = sphi 0, %s72
    %s87 = sphi 0, %s73
    %s91 = sphi 0, %s91
    %s93 = sphi 0, %s91
    %s94 = sphi 0, %s93
    %s108 = sphi 0, %s94
    %s112 = sphi 0, %s112
    %s114 = sphi 0, %s112
    %s115 = sphi 0, %s114
    %s129 = sphi 0, %s115
    %s133 = sphi 0, %s133
    %s135 = sphi 0, %s133
    %s136 = sphi 0, %s135
    %s150 = sphi 0, %s136
    %s154 = sphi 0, %s154
    %s156 = sphi 0, %s154
    %s157 = sphi 0, %s156
    %s171 = sphi 0, %s157
    %s177 = sphi 0, %s179
    %s180 = sphi 0, %s177
    %s181 = sphi 0, %s180
    %s197 = sphi 0, %s181
  $region4: #{network_forward.1} parent=0 // loop_header_branch
    %18 = sbr.rel (%p16) target = $region8
  $region5: #{network_forward.1} parent=0 // loop_body
    %s20 = ssub.s32 %s15, 1
    %s21 = ssub.s32 %s15, 2
    %s22 = sadd.s32 %s15, 1
    %s23 = ssub.s32 %s15, %s22
    %p24 = scmp.eq.s32.totalorder %s23, 0
    %s26 = sadd.s32 %s25, 1
    %s27 = scalar_select %p24, %s25, %s26
    %p30 = pneg %p24
    %p31 = scmp.eq.s32.totalorder %s15, 1
    %p32 = por %p30, %p31
    %p33 = scmp.ne.s32.totalorder %s25, %s28
    %p34 = scmp.eq.s32.totalorder %s15, 0
    %p35 = por %p33, %p34
    %p36 = scmp.ne.s32.totalorder %s25, %s28
    %p37 = scmp.eq.s32.totalorder %s20, 1
    %p38 = por %p36, %p37
    %p39 = scmp.ne.s32.totalorder %s28, %s29
    %p40 = scmp.eq.s32.totalorder %s20, 0
    %p41 = por %p39, %p40
    %p42 = scmp.ne.s32.totalorder %s28, %s29
    %p43 = scmp.eq.s32.totalorder %s21, 1
    %p44 = por %p42, %p43
    %p46 = scmp.ne.s32.totalorder %s29, %s45
    %p47 = scmp.eq.s32.totalorder %s21, 0
    %p48 = por %p46, %p47
    %s50 = sadd.s32 %s49, 1
    %p53 = scmp.eq.s32.totalorder %s15, 1
    %p54 = scmp.ne.s32.totalorder %s49, %s51
    %p55 = scmp.eq.s32.totalorder %s15, 0
    %p56 = por %p54, %p55
    %p57 = scmp.ne.s32.totalorder %s49, %s51
    %p58 = scmp.eq.s32.totalorder %s20, 1
    %p59 = por %p57, %p58
    %p60 = scmp.ne.s32.totalorder %s51, %s52
    %p61 = scmp.eq.s32.totalorder %s20, 0
    %p62 = por %p60, %p61
    %p63 = scmp.ne.s32.totalorder %s51, %s52
    %p64 = scmp.eq.s32.totalorder %s21, 1
    %p65 = por %p63, %p64
    %p67 = scmp.ne.s32.totalorder %s52, %s66
    %p68 = scmp.eq.s32.totalorder %s21, 0
    %p69 = por %p67, %p68
    %s71 = sadd.s32 %s70, 1
    %p74 = scmp.eq.s32.totalorder %s15, 1
    %p75 = scmp.ne.s32.totalorder %s70, %s72
    %p76 = scmp.eq.s32.totalorder %s15, 0
    %p77 = por %p75, %p76
    %p78 = scmp.ne.s32.totalorder %s70, %s72
    %p79 = scmp.eq.s32.totalorder %s20, 1
    %p80 = por %p78, %p79
    %p81 = scmp.ne.s32.totalorder %s72, %s73
    %p82 = scmp.eq.s32.totalorder %s20, 0
    %p83 = por %p81, %p82
    %p84 = scmp.ne.s32.totalorder %s72, %s73
    %p85 = scmp.eq.s32.totalorder %s21, 1
    %p86 = por %p84, %p85
    %p88 = scmp.ne.s32.totalorder %s73, %s87
    %p89 = scmp.eq.s32.totalorder %s21, 0
    %p90 = por %p88, %p89
    %s92 = sadd.s32 %s91, 1
    %p95 = scmp.eq.s32.totalorder %s15, 1
    %p96 = scmp.ne.s32.totalorder %s91, %s93
    %p97 = scmp.eq.s32.totalorder %s15, 0
    %p98 = por %p96, %p97
    %p99 = scmp.ne.s32.totalorder %s91, %s93
    %p100 = scmp.eq.s32.totalorder %s20, 1
    %p101 = por %p99, %p100
    %p102 = scmp.ne.s32.totalorder %s93, %s94
    %p103 = scmp.eq.s32.totalorder %s20, 0
    %p104 = por %p102, %p103
    %p105 = scmp.ne.s32.totalorder %s93, %s94
    %p106 = scmp.eq.s32.totalorder %s21, 1
    %p107 = por %p105, %p106
    %p109 = scmp.ne.s32.totalorder %s94, %s108
    %p110 = scmp.eq.s32.totalorder %s21, 0
    %p111 = por %p109, %p110
    %s113 = sadd.s32 %s112, 1
    %p116 = scmp.eq.s32.totalorder %s15, 1
    %p117 = scmp.ne.s32.totalorder %s112, %s114
    %p118 = scmp.eq.s32.totalorder %s15, 0
    %p119 = por %p117, %p118
    %p120 = scmp.ne.s32.totalorder %s112, %s114
    %p121 = scmp.eq.s32.totalorder %s20, 1
    %p122 = por %p120, %p121
    %p123 = scmp.ne.s32.totalorder %s114, %s115
    %p124 = scmp.eq.s32.totalorder %s20, 0
    %p125 = por %p123, %p124
    %p126 = scmp.ne.s32.totalorder %s114, %s115
    %p127 = scmp.eq.s32.totalorder %s21, 1
    %p128 = por %p126, %p127
    %p130 = scmp.ne.s32.totalorder %s115, %s129
    %p131 = scmp.eq.s32.totalorder %s21, 0
    %p132 = por %p130, %p131
    %s134 = sadd.s32 %s133, 1
    %p137 = scmp.eq.s32.totalorder %s15, 1
    %p138 = scmp.ne.s32.totalorder %s133, %s135
    %p139 = scmp.eq.s32.totalorder %s15, 0
    %p140 = por %p138, %p139
    %p141 = scmp.ne.s32.totalorder %s133, %s135
    %p142 = scmp.eq.s32.totalorder %s20, 1
    %p143 = por %p141, %p142
    %p144 = scmp.ne.s32.totalorder %s135, %s136
    %p145 = scmp.eq.s32.totalorder %s20, 0
    %p146 = por %p144, %p145
    %p147 = scmp.ne.s32.totalorder %s135, %s136
    %p148 = scmp.eq.s32.totalorder %s21, 1
    %p149 = por %p147, %p148
    %p151 = scmp.ne.s32.totalorder %s136, %s150
    %p152 = scmp.eq.s32.totalorder %s21, 0
    %p153 = por %p151, %p152
    %s155 = sadd.s32 %s154, 1
    %p158 = scmp.eq.s32.totalorder %s15, 1
    %p159 = scmp.ne.s32.totalorder %s154, %s156
    %p160 = scmp.eq.s32.totalorder %s15, 0
    %p161 = por %p159, %p160
    %p162 = scmp.ne.s32.totalorder %s154, %s156
    %p163 = scmp.eq.s32.totalorder %s20, 1
    %p164 = por %p162, %p163
    %p165 = scmp.ne.s32.totalorder %s156, %s157
    %p166 = scmp.eq.s32.totalorder %s20, 0
    %p167 = por %p165, %p166
    %p168 = scmp.ne.s32.totalorder %s156, %s157
    %p169 = scmp.eq.s32.totalorder %s21, 1
    %p170 = por %p168, %p169
    %p172 = scmp.ne.s32.totalorder %s157, %s171
    %p173 = scmp.eq.s32.totalorder %s21, 0
    %p174 = por %p172, %p173
    %s175 = ssub.s32 %s15, %s22
    %p176 = scmp.eq.s32.totalorder %s175, 0
    %s178 = sadd.s32 %s177, 1
    %s179 = scalar_select %p176, %s177, %s178
    %p182 = pneg %p176
    %p183 = scmp.eq.s32.totalorder %s15, 1
    %p184 = por %p182, %p183
    %p185 = scmp.ne.s32.totalorder %s177, %s180
    %p186 = scmp.eq.s32.totalorder %s15, 0
    %p187 = por %p185, %p186
    %p188 = scmp.ne.s32.totalorder %s177, %s180
    %p189 = scmp.eq.s32.totalorder %s20, 1
    %p190 = por %p188, %p189
    %p191 = scmp.ne.s32.totalorder %s180, %s181
    %p192 = scmp.eq.s32.totalorder %s20, 0
    %p193 = por %p191, %p192
    %p194 = scmp.ne.s32.totalorder %s180, %s181
    %p195 = scmp.eq.s32.totalorder %s21, 1
    %p196 = por %p194, %p195
    %p198 = scmp.ne.s32.totalorder %s181, %s197
    %p199 = scmp.eq.s32.totalorder %s21, 0
    %p200 = por %p198, %p199
    %p201 = scmp.le.s32.totalorder 1, %s15
    %p202 = scmp.lt.s32.totalorder %s15, 3
    %p203 = pnand %p201, %p202
    %p204 = pneg %p203
    // Predicated region
    $region9: #{network_forward.1} parent=5 // pred_check
      _
    $region10: #{network_forward.1} parent=5 // pred_check_branch
      %206 = sbr.rel (%p203) target = $region12
    $region11: #{network_forward.1} parent=5 // pred_region
      %s207 = ssub.s32 %s15, 1
      // Predicated region
      $region13: #{network_forward.1} parent=11 // pred_check
        %p208 = pneg %p62
      $region14: #{network_forward.1} parent=11 // pred_check_branch
        %210 = sbr.rel (%p208) target = $region16
      $region15: #{network_forward.1} parent=11 // pred_region
        _
      $region16: #{network_forward.1} parent=11 // pred_fallthru
        _
      // Predicated region
      $region17: #{network_forward.1} parent=11 // pred_check
        %p211 = pneg %p83
      $region18: #{network_forward.1} parent=11 // pred_check_branch
        %213 = sbr.rel (%p211) target = $region20
      $region19: #{network_forward.1} parent=11 // pred_region
        _
      $region20: #{network_forward.1} parent=11 // pred_fallthru
        _
      // Predicated region
      $region21: #{network_forward.1} parent=11 // pred_check
        %p214 = pneg %p104
      $region22: #{network_forward.1} parent=11 // pred_check_branch
        %216 = sbr.rel (%p214) target = $region24
      $region23: #{network_forward.1} parent=11 // pred_region
        _
      $region24: #{network_forward.1} parent=11 // pred_fallthru
        _
      // Predicated region
      $region25: #{network_forward.1} parent=11 // pred_check
        %p217 = pneg %p125
      $region26: #{network_forward.1} parent=11 // pred_check_branch
        %219 = sbr.rel (%p217) target = $region28
      $region27: #{network_forward.1} parent=11 // pred_region
        _
      $region28: #{network_forward.1} parent=11 // pred_fallthru
        _
      // Predicated region
      $region29: #{network_forward.1} parent=11 // pred_check
        %p220 = pneg %p146
      $region30: #{network_forward.1} parent=11 // pred_check_branch
        %222 = sbr.rel (%p220) target = $region32
      $region31: #{network_forward.1} parent=11 // pred_region
        _
      $region32: #{network_forward.1} parent=11 // pred_fallthru
        _
      // Predicated region
      $region33: #{network_forward.1} parent=11 // pred_check
        %p223 = pneg %p167
      $region34: #{network_forward.1} parent=11 // pred_check_branch
        %225 = sbr.rel (%p223) target = $region36
      $region35: #{network_forward.1} parent=11 // pred_region
        _
      $region36: #{network_forward.1} parent=11 // pred_fallthru
        _
    $region12: #{network_forward.1} parent=5 // pred_fallthru
      _
    %p226 = scmp.lt.s32.totalorder %s15, 2
    // Predicated region
    $region37: #{network_forward.1} parent=5 // pred_check
      %p227 = pneg %p226
    $region38: #{network_forward.1} parent=5 // pred_check_branch
      %229 = sbr.rel (%p227) target = $region40
    $region39: #{network_forward.1} parent=5 // pred_region
      // Predicated region
      $region41: #{network_forward.1} parent=39 // pred_check
        %p230 = pneg %p35
      $region42: #{network_forward.1} parent=39 // pred_check_branch
        %232 = sbr.rel (%p230) target = $region44
      $region43: #{network_forward.1} parent=39 // pred_region
        %s233 = smul.u32 16, %s15
        %p234 = scmp.lt.s32.totalorder %s233, 31
        %s235 = scalar_select %p234, %s233, 31
        %s236 = smul.addr %s235, 8
        %s237 = scalar_lea.vmem %s0, %s236
        %s238 = smul.u32 16, %s15
      $region44: #{network_forward.1} parent=39 // pred_fallthru
        _
    $region40: #{network_forward.1} parent=5 // pred_fallthru
      _
    %p239 = scmp.le.s32.totalorder 1, %s15
    %p240 = scmp.lt.s32.totalorder %s15, 3
    %p241 = pnand %p239, %p240
    %p242 = pneg %p241
    // Predicated region
    $region45: #{network_forward.1} parent=5 // pred_check
      _
    $region46: #{network_forward.1} parent=5 // pred_check_branch
      %244 = sbr.rel (%p241) target = $region48
    $region47: #{network_forward.1} parent=5 // pred_region
      %s245 = ssub.s32 %s15, 1
      %s246 = smul.u32 16, %s20
      %p247 = scmp.lt.s32.totalorder %s246, 31
      %s248 = scalar_select %p247, %s246, 31
      %s249 = smul.addr %s248, 8
      %s250 = scalar_lea.vmem %s0, %s249
      %p251 = pneg %p41
      %p252 = pneg %p38
      %p253 = pneg %p62
      %p254 = pneg %p59
      %p255 = pneg %p83
      %p256 = pneg %p80
      %p257 = pneg %p104
      %p258 = pneg %p101
      %p259 = pneg %p125
      %p260 = pneg %p122
      %p261 = pneg %p146
      %p262 = pneg %p143
      %p263 = pneg %p167
      %p264 = pneg %p164
      %p265 = pneg %p193
      %p266 = pneg %p190
      %s267 = smul.u32 16, %s20
      %p268 = scmp.lt.s32.totalorder %s267, 31
      %s269 = scalar_select %p268, %s267, 31
      %s270 = smul.addr %s269, 8
      %s271 = scalar_lea.vmem %s7, %s270
      %s272 = smul.u32 16, %s20
      %p273 = scmp.lt.s32.totalorder %s272, 31
      %s274 = scalar_select %p273, %s272, 31
      %s275 = smul.addr %s274, 8
      %s276 = scalar_lea.vmem %s0, %s275
      %s277 = smul.u32 16, %s20
      %s278 = smul.u32 16, %s20
      %p279 = scmp.lt.s32.totalorder %s278, 31
      %s280 = scalar_select %p279, %s278, 31
      %s281 = smul.addr %s280, 8
      %s282 = scalar_lea.vmem %s7, %s281
      %s283 = smul.u32 16, %s20
      %v285 = vld [vmem:[%s1] sm:$0xf]
      %v286 = vld [vmem:[%s1 + $0x4] sm:$0xf]
      %v287 = vld [vmem:[%s1 + $0x8] sm:$0xf]
      %v288 = vld [vmem:[%s1 + $0xc] sm:$0xf]
      %v289 = vld [vmem:[%s276] sm:$0xff]
      %v290 = vld [vmem:[%s276 + $0x8] sm:$0xff]
      %v291 = vld [vmem:[%s276 + $0x10] sm:$0xff]
      %v292 = vld [vmem:[%s276 + $0x18] sm:$0xff]
      %v293 = vld [vmem:[%s276 + $0x20] sm:$0xff]
      %v294 = vld [vmem:[%s276 + $0x28] sm:$0xff]
      %v295 = vld [vmem:[%s276 + $0x30] sm:$0xff]
      %v296 = vld [vmem:[%s276 + $0x38] sm:$0xff]
      %v297 = vld [vmem:[%s276 + $0x40] sm:$0xff]
      %v298 = vld [vmem:[%s276 + $0x48] sm:$0xff]
      %v299 = vld [vmem:[%s276 + $0x50] sm:$0xff]
      %v300 = vld [vmem:[%s276 + $0x58] sm:$0xff]
      %v301 = vld [vmem:[%s276 + $0x60] sm:$0xff]
      %v302 = vld [vmem:[%s276 + $0x68] sm:$0xff]
      %v303 = vld [vmem:[%s276 + $0x70] sm:$0xff]
      %v304 = vld [vmem:[%s276 + $0x78] sm:$0xff]
      %v305 = vpack.c.bf16 %v290, %v289
      %v306 = vpack.c.bf16 %v292, %v291
      %v307 = vpack.c.bf16 %v294, %v293
      %v308 = vpack.c.bf16 %v296, %v295
      %v309 = vpack.c.bf16 %v298, %v297
      %v310 = vpack.c.bf16 %v300, %v299
      %v311 = vpack.c.bf16 %v302, %v301
      %v312 = vpack.c.bf16 %v304, %v303
      %v313 = vld [vmem:[%s2] sm:$0x1]
      %v315 = vlaneseq
      %v316 = vshrl.u32 %v315, 7
      %v317 = vsub.s32 0, %v316
      %v318 = vrot.slane %v313, %v317
      %v324 = vunpack.c.l.b16 %v285
      %v325 = vunpack.c.l.b16 %v286
      %v326 = vunpack.c.l.b16 %v287
      %v327 = vunpack.c.l.b16 %v288
      %v328 = vpack.c.b16 %v325, %v324
      %v329 = vpack.c.b16 %v327, %v326
      %vm332 = vcmask 261120
      %v334 = vsel %vm332, %v305, 0
      %v337 = vsel %vm332, %v306, 0
      %v340 = vsel %vm332, %v307, 0
      %v343 = vsel %vm332, %v308, 0
      %v346 = vsel %vm332, %v309, 0
      %v349 = vsel %vm332, %v310, 0
      %v352 = vsel %vm332, %v311, 0
      %v355 = vsel %vm332, %v312, 0
      %357 = vmatprep.subr.bf16.mxu0 0
      %358 = vmatpush1.bf16.msra.mxu0 %v328
      %359 = vmatprep.subr.bf16.mxu0 0
      %360 = vmatpush1.bf16.msra.mxu0 %v329
      %361 = vmatprep.subr.bf16.mxu0 0
      %362 = vmatpush1.bf16.msra.mxu0 0
      %363 = vmatprep.subr.bf16.mxu0 0
      %364 = vmatpush1.bf16.msra.mxu0 0
      %365 = vmatprep.subr.bf16.mxu0 0
      %366 = vmatpush1.bf16.msra.mxu0 0
      %367 = vmatprep.subr.bf16.mxu0 0
      %368 = vmatpush1.bf16.msra.mxu0 0
      %369 = vmatprep.subr.bf16.mxu0 0
      %370 = vmatpush1.bf16.msra.mxu0 0
      %371 = vmatprep.subr.bf16.mxu0 0
      %372 = vmatpush1.bf16.msra.mxu0 0
      %373 = vmatprep.subr.bf16.mxu0 0
      %374 = vmatpush1.bf16.msra.mxu0 0
      %375 = vmatprep.subr.bf16.mxu0 0
      %376 = vmatpush1.bf16.msra.mxu0 0
      %377 = vmatprep.subr.bf16.mxu0 0
      %378 = vmatpush1.bf16.msra.mxu0 0
      %379 = vmatprep.subr.bf16.mxu0 0
      %380 = vmatpush1.bf16.msra.mxu0 0
      %381 = vmatprep.subr.bf16.mxu0 0
      %382 = vmatpush1.bf16.msra.mxu0 0
      %383 = vmatprep.subr.bf16.mxu0 0
      %384 = vmatpush1.bf16.msra.mxu0 0
      %385 = vmatprep.subr.bf16.mxu0 0
      %386 = vmatpush1.bf16.msra.mxu0 0
      %387 = vmatprep.subr.bf16.mxu0 0
      %388 = vmatpush1.bf16.msra.mxu0 0
      %389 = vmatprep.mubr.bf16.mxu0 0
      %390 = vmatmul.mubr.bf16.gmra.mrb[0].mxu0 %v334
      %v391 = vpop.f32.mrb[0].mxu0
      %v392 = vadd.f32 %v318, %v391
      %v393 = vpop.f32.mrb[0].mxu0
      %v394 = vpop.f32.mrb[0].mxu0
      %v395 = vadd.f32 %v318, %v394
      %v396 = vpop.f32.mrb[0].mxu0
      %397 = vmatprep.mubr.bf16.mxu0 0
      %398 = vmatmul.mubr.bf16.gmra.mrb[0].mxu0 %v337
      %v399 = vpop.f32.mrb[0].mxu0
      %v400 = vadd.f32 %v318, %v399
      %v401 = vpop.f32.mrb[0].mxu0
      %v402 = vpop.f32.mrb[0].mxu0
      %v403 = vadd.f32 %v318, %v402
      %v404 = vpop.f32.mrb[0].mxu0
      %405 = vmatprep.mubr.bf16.mxu0 0
      %406 = vmatmul.mubr.bf16.gmra.mrb[0].mxu0 %v340
      %v407 = vpop.f32.mrb[0].mxu0
      %v408 = vadd.f32 %v318, %v407
      %v409 = vpop.f32.mrb[0].mxu0
      %v410 = vpop.f32.mrb[0].mxu0
      %v411 = vadd.f32 %v318, %v410
      %v412 = vpop.f32.mrb[0].mxu0
      %413 = vmatprep.mubr.bf16.mxu0 0
      %414 = vmatmul.mubr.bf16.gmra.mrb[0].mxu0 %v343
      %v415 = vpop.f32.mrb[0].mxu0
      %v416 = vadd.f32 %v318, %v415
      %v417 = vpop.f32.mrb[0].mxu0
      %v418 = vpop.f32.mrb[0].mxu0
      %v419 = vadd.f32 %v318, %v418
      %v420 = vpop.f32.mrb[0].mxu0
      %421 = vmatprep.mubr.bf16.mxu0 0
      %422 = vmatmul.mubr.bf16.gmra.mrb[0].mxu0 %v346
      %v423 = vpop.f32.mrb[0].mxu0
      %v424 = vadd.f32 %v318, %v423
      %v425 = vpop.f32.mrb[0].mxu0
      %v426 = vpop.f32.mrb[0].mxu0
      %v427 = vadd.f32 %v318, %v426
      %v428 = vpop.f32.mrb[0].mxu0
      %429 = vmatprep.mubr.bf16.mxu0 0
      %430 = vmatmul.mubr.bf16.gmra.mrb[0].mxu0 %v349
      %v431 = vpop.f32.mrb[0].mxu0
      %v432 = vadd.f32 %v318, %v431
      %v433 = vpop.f32.mrb[0].mxu0
      %v434 = vpop.f32.mrb[0].mxu0
      %v435 = vadd.f32 %v318, %v434
      %v436 = vpop.f32.mrb[0].mxu0
      %437 = vmatprep.mubr.bf16.mxu0 0
      %438 = vmatmul.mubr.bf16.gmra.mrb[0].mxu0 %v352
      %v439 = vpop.f32.mrb[0].mxu0
      %v440 = vadd.f32 %v318, %v439
      %v441 = vpop.f32.mrb[0].mxu0
      %v442 = vpop.f32.mrb[0].mxu0
      %v443 = vadd.f32 %v318, %v442
      %v444 = vpop.f32.mrb[0].mxu0
      %445 = vmatprep.mubr.bf16.mxu0 0
      %446 = vmatmul.mubr.bf16.gmra.mrb[0].mxu0 %v355
      %v447 = vpop.f32.mrb[0].mxu0
      %v448 = vadd.f32 %v318, %v447
      %v449 = vpop.f32.mrb[0].mxu0
      %v450 = vpop.f32.mrb[0].mxu0
      %v451 = vadd.f32 %v318, %v450
      %v452 = vpop.f32.mrb[0].mxu0
      %453 = vdwg.mxu0
      %v454 = vmax.f32 %v392, 0.0
      %v455 = vmax.f32 %v395, 0.0
      %v456 = vmax.f32 %v400, 0.0
      %v457 = vmax.f32 %v403, 0.0
      %v458 = vmax.f32 %v408, 0.0
      %v459 = vmax.f32 %v411, 0.0
      %v460 = vmax.f32 %v416, 0.0
      %v461 = vmax.f32 %v419, 0.0
      %v462 = vmax.f32 %v424, 0.0
      %v463 = vmax.f32 %v427, 0.0
      %v464 = vmax.f32 %v432, 0.0
      %v465 = vmax.f32 %v435, 0.0
      %v466 = vmax.f32 %v440, 0.0
      %v467 = vmax.f32 %v443, 0.0
      %v468 = vmax.f32 %v448, 0.0
      %v469 = vmax.f32 %v451, 0.0
      %v470 = vld [vmem:[%s3] sm:$0xf]
      %v471 = vld [vmem:[%s3 + $0x4] sm:$0xf]
      %v472 = vld [vmem:[%s3 + $0x8] sm:$0xf]
      %v473 = vld [vmem:[%s3 + $0xc] sm:$0xf]
      %v474 = vld [vmem:[%s3 + $0x10] sm:$0xf]
      %v475 = vld [vmem:[%s3 + $0x14] sm:$0xf]
      %v476 = vld [vmem:[%s3 + $0x18] sm:$0xf]
      %v477 = vld [vmem:[%s3 + $0x1c] sm:$0xf]
      %v478 = vld [vmem:[%s4] sm:$0x1]
      %v479 = vpack.c.bf16 %v455, %v454
      %v480 = vpack.c.bf16 %v457, %v456
      %v481 = vpack.c.bf16 %v459, %v458
      %v482 = vpack.c.bf16 %v461, %v460
      %v483 = vpack.c.bf16 %v463, %v462
      %v484 = vpack.c.bf16 %v465, %v464
      %v485 = vpack.c.bf16 %v467, %v466
      %v486 = vpack.c.bf16 %v469, %v468
      %v488 = vlaneseq
      %v489 = vshrl.u32 %v488, 7
      %v490 = vsub.s32 0, %v489
      %v491 = vrot.slane %v478, %v490
      %v501 = vunpack.c.l.b16 %v470
      %v502 = vunpack.c.l.b16 %v471
      %v503 = vunpack.c.l.b16 %v472
      %v504 = vunpack.c.l.b16 %v473
      %v505 = vunpack.c.l.b16 %v474
      %v506 = vunpack.c.l.b16 %v475
      %v507 = vunpack.c.l.b16 %v476
      %v508 = vunpack.c.l.b16 %v477
      %v509 = vpack.c.b16 %v502, %v501
      %v510 = vpack.c.b16 %v504, %v503
      %v511 = vpack.c.b16 %v506, %v505
      %v512 = vpack.c.b16 %v508, %v507
      %vm517 = vcmask 523264
      %v519 = vsel %vm517, %v479, 0
      %v522 = vsel %vm517, %v480, 0
      %v525 = vsel %vm517, %v481, 0
      %v528 = vsel %vm517, %v482, 0
      %v531 = vsel %vm517, %v483, 0
      %v534 = vsel %vm517, %v484, 0
      %v537 = vsel %vm517, %v485, 0
      %v540 = vsel %vm517, %v486, 0
      %542 = vmatprep.subr.bf16.mxu0 0
      %543 = vmatpush1.bf16.msra.mxu0 %v509
      %544 = vmatprep.subr.bf16.mxu0 0
      %545 = vmatpush1.bf16.msra.mxu0 %v510
      %546 = vmatprep.subr.bf16.mxu0 0
      %547 = vmatpush1.bf16.msra.mxu0 %v511
      %548 = vmatprep.subr.bf16.mxu0 0
      %549 = vmatpush1.bf16.msra.mxu0 %v512
      %550 = vmatprep.subr.bf16.mxu0 0
      %551 = vmatpush1.bf16.msra.mxu0 0
      %552 = vmatprep.subr.bf16.mxu0 0
      %553 = vmatpush1.bf16.msra.mxu0 0
      %554 = vmatprep.subr.bf16.mxu0 0
      %555 = vmatpush1.bf16.msra.mxu0 0
      %556 = vmatprep.subr.bf16.mxu0 0
      %557 = vmatpush1.bf16.msra.mxu0 0
      %558 = vmatprep.subr.bf16.mxu0 0
      %559 = vmatpush1.bf16.msra.mxu0 0
      %560 = vmatprep.subr.bf16.mxu0 0
      %561 = vmatpush1.bf16.msra.mxu0 0
      %562 = vmatprep.subr.bf16.mxu0 0
      %563 = vmatpush1.bf16.msra.mxu0 0
      %564 = vmatprep.subr.bf16.mxu0 0
      %565 = vmatpush1.bf16.msra.mxu0 0
      %566 = vmatprep.subr.bf16.mxu0 0
      %567 = vmatpush1.bf16.msra.mxu0 0
      %568 = vmatprep.subr.bf16.mxu0 0
      %569 = vmatpush1.bf16.msra.mxu0 0
      %570 = vmatprep.subr.bf16.mxu0 0
      %571 = vmatpush1.bf16.msra.mxu0 0
      %572 = vmatprep.subr.bf16.mxu0 0
      %573 = vmatpush1.bf16.msra.mxu0 0
      %574 = vmatprep.mubr.bf16.mxu0 0
      %575 = vmatmul.mubr.bf16.gmra.mrb[0].mxu0 %v519
      %v576 = vpop.f32.mrb[0].mxu0
      %v577 = vadd.f32 %v491, %v576
      %v578 = vpop.f32.mrb[0].mxu0
      %v579 = vpop.f32.mrb[0].mxu0
      %v580 = vadd.f32 %v491, %v579
      %v581 = vpop.f32.mrb[0].mxu0
      %582 = vmatprep.mubr.bf16.mxu0 0
      %583 = vmatmul.mubr.bf16.gmra.mrb[0].mxu0 %v522
      %v584 = vpop.f32.mrb[0].mxu0
      %v585 = vadd.f32 %v491, %v584
      %v586 = vpop.f32.mrb[0].mxu0
      %v587 = vpop.f32.mrb[0].mxu0
      %v588 = vadd.f32 %v491, %v587
      %v589 = vpop.f32.mrb[0].mxu0
      %590 = vmatprep.mubr.bf16.mxu0 0
      %591 = vmatmul.mubr.bf16.gmra.mrb[0].mxu0 %v525
      %v592 = vpop.f32.mrb[0].mxu0
      %v593 = vadd.f32 %v491, %v592
      %v594 = vpop.f32.mrb[0].mxu0
      %v595 = vpop.f32.mrb[0].mxu0
      %v596 = vadd.f32 %v491, %v595
      %v597 = vpop.f32.mrb[0].mxu0
      %598 = vmatprep.mubr.bf16.mxu0 0
      %599 = vmatmul.mubr.bf16.gmra.mrb[0].mxu0 %v528
      %v600 = vpop.f32.mrb[0].mxu0
      %v601 = vadd.f32 %v491, %v600
      %v602 = vpop.f32.mrb[0].mxu0
      %v603 = vpop.f32.mrb[0].mxu0
      %v604 = vadd.f32 %v491, %v603
      %v605 = vpop.f32.mrb[0].mxu0
      %606 = vmatprep.mubr.bf16.mxu0 0
      %607 = vmatmul.mubr.bf16.gmra.mrb[0].mxu0 %v531
      %v608 = vpop.f32.mrb[0].mxu0
      %v609 = vadd.f32 %v491, %v608
      %v610 = vpop.f32.mrb[0].mxu0
      %v611 = vpop.f32.mrb[0].mxu0
      %v612 = vadd.f32 %v491, %v611
      %v613 = vpop.f32.mrb[0].mxu0
      %614 = vmatprep.mubr.bf16.mxu0 0
      %615 = vmatmul.mubr.bf16.gmra.mrb[0].mxu0 %v534
      %v616 = vpop.f32.mrb[0].mxu0
      %v617 = vadd.f32 %v491, %v616
      %v618 = vpop.f32.mrb[0].mxu0
      %v619 = vpop.f32.mrb[0].mxu0
      %v620 = vadd.f32 %v491, %v619
      %v621 = vpop.f32.mrb[0].mxu0
      %622 = vmatprep.mubr.bf16.mxu0 0
      %623 = vmatmul.mubr.bf16.gmra.mrb[0].mxu0 %v537
      %v624 = vpop.f32.mrb[0].mxu0
      %v625 = vadd.f32 %v491, %v624
      %v626 = vpop.f32.mrb[0].mxu0
      %v627 = vpop.f32.mrb[0].mxu0
      %v628 = vadd.f32 %v491, %v627
      %v629 = vpop.f32.mrb[0].mxu0
      %630 = vmatprep.mubr.bf16.mxu0 0
      %631 = vmatmul.mubr.bf16.gmra.mrb[0].mxu0 %v540
      %v632 = vpop.f32.mrb[0].mxu0
      %v633 = vadd.f32 %v491, %v632
      %v634 = vpop.f32.mrb[0].mxu0
      %v635 = vpop.f32.mrb[0].mxu0
      %v636 = vadd.f32 %v491, %v635
      %v637 = vpop.f32.mrb[0].mxu0
      %638 = vdwg.mxu0
      %v639 = vmax.f32 %v577, 0.0
      %v640 = vmax.f32 %v580, 0.0
      %v641 = vmax.f32 %v585, 0.0
      %v642 = vmax.f32 %v588, 0.0
      %v643 = vmax.f32 %v593, 0.0
      %v644 = vmax.f32 %v596, 0.0
      %v645 = vmax.f32 %v601, 0.0
      %v646 = vmax.f32 %v604, 0.0
      %v647 = vmax.f32 %v609, 0.0
      %v648 = vmax.f32 %v612, 0.0
      %v649 = vmax.f32 %v617, 0.0
      %v650 = vmax.f32 %v620, 0.0
      %v651 = vmax.f32 %v625, 0.0
      %v652 = vmax.f32 %v628, 0.0
      %v653 = vmax.f32 %v633, 0.0
      %v654 = vmax.f32 %v636, 0.0
      %v655 = vld [vmem:[%s5] sm:$0x1]
      %v656 = vld [vmem:[#allocation2] sm:$0x1]
      %v657 = vunpack.c.l.bf16 %v655
      %v658 = vlaneseq
      %v659 = vshrl.u32 %v658, 7
      %v660 = vsub.s32 0, %v659
      %v661 = vrot.slane %v657, %v660
      %v662 = vmul.f32 %v639, %v661
      %v663 = vmul.f32 %v640, %v661
      %v664 = vmul.f32 %v641, %v661
      %v665 = vmul.f32 %v642, %v661
      %v666 = vmul.f32 %v643, %v661
      %v667 = vmul.f32 %v644, %v661
      %v668 = vmul.f32 %v645, %v661
      %v669 = vmul.f32 %v646, %v661
      %v670 = vmul.f32 %v647, %v661
      %v671 = vmul.f32 %v648, %v661
      %v672 = vmul.f32 %v649, %v661
      %v673 = vmul.f32 %v650, %v661
      %v674 = vmul.f32 %v651, %v661
      %v675 = vmul.f32 %v652, %v661
      %v676 = vmul.f32 %v653, %v661
      %v677 = vmul.f32 %v654, %v661
      %v678 = vsel %vm517, %v662, 0.0
      %679 = vadd.xlane.f32.xlu0 %v678
      %v680 = vpop.xlane.xlu0 %679
      %v681 = vsel %vm517, %v663, 0.0
      %682 = vadd.xlane.f32.xlu0 %v681
      %v683 = vpop.xlane.xlu0 %682
      %v684 = vsel %vm517, %v664, 0.0
      %685 = vadd.xlane.f32.xlu0 %v684
      %v686 = vpop.xlane.xlu0 %685
      %v687 = vsel %vm517, %v665, 0.0
      %688 = vadd.xlane.f32.xlu0 %v687
      %v689 = vpop.xlane.xlu0 %688
      %v690 = vsel %vm517, %v666, 0.0
      %691 = vadd.xlane.f32.xlu0 %v690
      %v692 = vpop.xlane.xlu0 %691
      %v693 = vsel %vm517, %v667, 0.0
      %694 = vadd.xlane.f32.xlu0 %v693
      %v695 = vpop.xlane.xlu0 %694
      %v696 = vsel %vm517, %v668, 0.0
      %697 = vadd.xlane.f32.xlu0 %v696
      %v698 = vpop.xlane.xlu0 %697
      %v699 = vsel %vm517, %v669, 0.0
      %700 = vadd.xlane.f32.xlu0 %v699
      %v701 = vpop.xlane.xlu0 %700
      %v702 = vsel %vm517, %v670, 0.0
      %703 = vadd.xlane.f32.xlu0 %v702
      %v704 = vpop.xlane.xlu0 %703
      %v705 = vsel %vm517, %v671, 0.0
      %706 = vadd.xlane.f32.xlu0 %v705
      %v707 = vpop.xlane.xlu0 %706
      %v708 = vsel %vm517, %v672, 0.0
      %709 = vadd.xlane.f32.xlu0 %v708
      %v710 = vpop.xlane.xlu0 %709
      %v711 = vsel %vm517, %v673, 0.0
      %712 = vadd.xlane.f32.xlu0 %v711
      %v713 = vpop.xlane.xlu0 %712
      %v714 = vsel %vm517, %v674, 0.0
      %715 = vadd.xlane.f32.xlu0 %v714
      %v716 = vpop.xlane.xlu0 %715
      %v717 = vsel %vm517, %v675, 0.0
      %718 = vadd.xlane.f32.xlu0 %v717
      %v719 = vpop.xlane.xlu0 %718
      %v720 = vsel %vm517, %v676, 0.0
      %721 = vadd.xlane.f32.xlu0 %v720
      %v722 = vpop.xlane.xlu0 %721
      %v723 = vsel %vm517, %v677, 0.0
      %724 = vadd.xlane.f32.xlu0 %v723
      %v725 = vpop.xlane.xlu0 %724
      %v727 = vlaneseq
      %v728 = vshrl.u32 %v727, 7
      %v729 = vsub.s32 0, %v728
      %v730 = vrot.slane %v656, %v729
      %v732 = vadd.f32 %v680, %v730
      %v733 = vadd.f32 %v683, %v730
      %v734 = vadd.f32 %v686, %v730
      %v735 = vadd.f32 %v689, %v730
      %v736 = vadd.f32 %v692, %v730
      %v737 = vadd.f32 %v695, %v730
      %v738 = vadd.f32 %v698, %v730
      %v739 = vadd.f32 %v701, %v730
      %v740 = vadd.f32 %v704, %v730
      %v741 = vadd.f32 %v707, %v730
      %v742 = vadd.f32 %v710, %v730
      %v743 = vadd.f32 %v713, %v730
      %v744 = vadd.f32 %v716, %v730
      %v745 = vadd.f32 %v719, %v730
      %v746 = vadd.f32 %v722, %v730
      %v747 = vadd.f32 %v725, %v730
      %vm748 = vcmask 7168
      %749 = vst.msk [vmem:[%s282] sm:$0xff] %vm748, %v732
      %750 = vst.msk [vmem:[%s282 + $0x8] sm:$0xff] %vm748, %v733
      %751 = vst.msk [vmem:[%s282 + $0x10] sm:$0xff] %vm748, %v734
      %752 = vst.msk [vmem:[%s282 + $0x18] sm:$0xff] %vm748, %v735
      %753 = vst.msk [vmem:[%s282 + $0x20] sm:$0xff] %vm748, %v736
      %754 = vst.msk [vmem:[%s282 + $0x28] sm:$0xff] %vm748, %v737
      %755 = vst.msk [vmem:[%s282 + $0x30] sm:$0xff] %vm748, %v738
      %756 = vst.msk [vmem:[%s282 + $0x38] sm:$0xff] %vm748, %v739
      %757 = vst.msk [vmem:[%s282 + $0x40] sm:$0xff] %vm748, %v740
      %758 = vst.msk [vmem:[%s282 + $0x48] sm:$0xff] %vm748, %v741
      %759 = vst.msk [vmem:[%s282 + $0x50] sm:$0xff] %vm748, %v742
      %760 = vst.msk [vmem:[%s282 + $0x58] sm:$0xff] %vm748, %v743
      %761 = vst.msk [vmem:[%s282 + $0x60] sm:$0xff] %vm748, %v744
      %762 = vst.msk [vmem:[%s282 + $0x68] sm:$0xff] %vm748, %v745
      %763 = vst.msk [vmem:[%s282 + $0x70] sm:$0xff] %vm748, %v746
      %764 = vst.msk [vmem:[%s282 + $0x78] sm:$0xff] %vm748, %v747
      %s765 = smul.u32 16, %s20
      %p766 = scmp.lt.s32.totalorder %s765, 31
      %s767 = scalar_select %p766, %s765, 31
      %s768 = smul.addr %s767, 8
      %s769 = scalar_lea.vmem %s7, %s768
      // Predicated region
      $region49: #{network_forward.1} parent=47 // pred_check
        %p770 = pneg %p190
      $region50: #{network_forward.1} parent=47 // pred_check_branch
        %772 = sbr.rel (%p770) target = $region52
      $region51: #{network_forward.1} parent=47 // pred_region
        %s773 = smul.u32 16, %s20
      $region52: #{network_forward.1} parent=47 // pred_fallthru
        _
    $region48: #{network_forward.1} parent=5 // pred_fallthru
      _
    %p774 = scmp.le.s32.totalorder 2, %s15
    // Predicated region
    $region53: #{network_forward.1} parent=5 // pred_check
      %p775 = pneg %p774
    $region54: #{network_forward.1} parent=5 // pred_check_branch
      %777 = sbr.rel (%p775) target = $region56
    $region55: #{network_forward.1} parent=5 // pred_region
      %s778 = ssub.s32 %s15, 2
      // Predicated region
      $region57: #{network_forward.1} parent=55 // pred_check
        %p779 = pneg %p196
      $region58: #{network_forward.1} parent=55 // pred_check_branch
        %781 = sbr.rel (%p779) target = $region60
      $region59: #{network_forward.1} parent=55 // pred_region
        %s782 = smul.u32 16, %s21
        %p783 = scmp.lt.s32.totalorder %s782, 31
        %s784 = scalar_select %p783, %s782, 31
        %s785 = smul.addr %s784, 8
        %s786 = scalar_lea.vmem %s7, %s785
      $region60: #{network_forward.1} parent=55 // pred_fallthru
        _
    $region56: #{network_forward.1} parent=5 // pred_fallthru
      _
  $region6: #{network_forward.1} parent=0 // loop_footer
    %s19 = sadd.s32 1, %s15
  $region7: #{network_forward.1} parent=0 // loop_footer_branch
    %14 = sbr.rel target = $region3
  $region8: #{network_forward.1} parent=0 // loop_exit
    _

</llo_original>
